<compile_context>
chip_gen: v5e
topology: v5e:2x2
jax: 0.10.0
libtpu: 0.0.40
codegen_flags: <defaults>
</compile_context>

<pallas_src>
import jax
import jax.numpy as jnp
from jax.experimental import pallas as pl
from jax.experimental.pallas import tpu as pltpu


def mlp_kernel(x_ref, w1_ref, b1_ref, w2_ref, b2_ref, feat_ref, prob_ref):
    # ---- dense + relu (MXU matmul + VPU elementwise) ----
    x = x_ref[...]
    h = jnp.dot(x, w1_ref[...], preferred_element_type=jnp.float32) + b1_ref[...]
    h = jnp.maximum(h, 0.0)
    # dropout_rate = 0.0 -> identity (no-op)
    feat_ref[...] = h.astype(feat_ref.dtype)

    # ---- classifier + softmax over last dim ----
    # Logits are lane-padded; padded lanes carry bias -1e30, so exp underflows to 0
    # and they contribute nothing to the denominator.
    logits = jnp.dot(h, w2_ref[...], preferred_element_type=jnp.float32) + b2_ref[...]
    m = jnp.max(logits, axis=-1, keepdims=True)
    e = jnp.exp(logits - m)
    denom = jnp.sum(e, axis=-1, keepdims=True)
    prob_ref[...] = (e * pl.reciprocal(denom, approx=True)).astype(prob_ref.dtype)


def _round_up(n, m):
    return ((n + m - 1) // m) * m


def mlp_forward(x, w1, b1, w2, b2, *, tb=1024):
    """x: (B, H) f32; w1: (H, 128); b1: (1, 128); w2: (128, O); b2: (1, O)."""
    B, H = x.shape
    F1 = w1.shape[1]
    O = w2.shape[1]

    # Lane-dense probs output: pad classifier output dim to a multiple of 128.
    O_pad = _round_up(max(O, 128), 128)
    if O_pad != O:
        w2p = jnp.pad(w2, ((0, 0), (0, O_pad - O)))
        # Padded logits = -1e30 -> exp underflows to 0 -> padded probs are exactly 0.
        b2p = jnp.pad(b2, ((0, 0), (0, O_pad - O)), constant_values=-1e30)
    else:
        w2p, b2p = w2, b2

    # Batch tile: multiple of 8 sublanes (MXU-M friendly when the batch is large),
    # batch padded so the grid divides evenly.
    TB = min(tb, _round_up(B, 8))
    TB = _round_up(TB, 8)
    Bp = _round_up(B, TB)
    xp = jnp.pad(x, ((0, Bp - B), (0, 0))) if Bp != B else x
    grid = (Bp // TB,)

    feat, probs = pl.pallas_call(
        mlp_kernel,
        out_shape=(
            jax.ShapeDtypeStruct((Bp, F1), jnp.float32),
            jax.ShapeDtypeStruct((Bp, O_pad), jnp.float32),
        ),
        grid=grid,
        in_specs=[
            pl.BlockSpec((TB, H), lambda i: (i, 0)),       # x: tiled over batch
            pl.BlockSpec((H, F1), lambda i: (0, 0)),       # w1: resident in VMEM
            pl.BlockSpec((1, F1), lambda i: (0, 0)),       # b1: resident
            pl.BlockSpec((F1, O_pad), lambda i: (0, 0)),   # w2 (lane-padded): resident
            pl.BlockSpec((1, O_pad), lambda i: (0, 0)),    # b2 (lane-padded): resident
        ],
        out_specs=(
            pl.BlockSpec((TB, F1), lambda i: (i, 0)),
            pl.BlockSpec((TB, O_pad), lambda i: (i, 0)),
        ),
        compiler_params=pltpu.CompilerParams(
            dimension_semantics=("parallel",),          # megacore sharding on v7x
            vmem_limit_bytes=32 * 1024 * 1024,          # safe on v5e/v6e/v7x
        ),
    )(xp, w1, b1, w2p, b2p)

    return feat[:B], probs[:B, :O]


def mlp_reference(x, w1, b1, w2, b2):
    h = jnp.maximum(x @ w1 + b1, 0.0)
    logits = h @ w2 + b2
    return h, jax.nn.softmax(logits, axis=-1)


def _make_params(key, hidden_size, output_num):
    k_w1, k_b1, k_w2, k_b2 = jax.random.split(key, 4)
    bound1 = 1.0 / (hidden_size ** 0.5)
    w1 = jax.random.uniform(k_w1, (hidden_size, 128), jnp.float32, -bound1, bound1)
    b1 = jax.random.uniform(k_b1, (1, 128), jnp.float32, -bound1, bound1)
    bound2 = 1.0 / (128 ** 0.5)
    w2 = jax.random.uniform(k_w2, (128, output_num), jnp.float32, -bound2, bound2)
    b2 = jax.random.uniform(k_b2, (1, output_num), jnp.float32, -bound2, bound2)
    return w1, b1, w2, b2


def _check(x, w1, b1, w2, b2, tb):
    feat, probs = mlp_forward(x, w1, b1, w2, b2, tb=tb)
    jax.block_until_ready((feat, probs))
    feat_ref, probs_ref = mlp_reference(x, w1, b1, w2, b2)
    assert feat.shape == feat_ref.shape and probs.shape == probs_ref.shape
    assert jnp.allclose(feat, feat_ref, atol=1e-5), "feature mismatch"
    # approx reciprocal (EUP vrcp) -> slightly looser tolerance on probs
    assert jnp.allclose(probs, probs_ref, rtol=1e-2, atol=1e-3), "softmax mismatch"
    assert jnp.allclose(jnp.sum(probs, axis=-1), 1.0, atol=1e-2), "probs do not sum to 1"


if __name__ == "__main__":
    key = jax.random.PRNGKey(0)
    hidden_size = 32
    output_num = 8

    k_x1, k_x2, k_p = jax.random.split(key, 3)
    w1, b1, w2, b2 = _make_params(k_p, hidden_size, output_num)

    # Small case (batch padded up to one 8-row tile).
    x_small = jax.random.normal(k_x1, (2, hidden_size), dtype=jnp.float32)
    _check(x_small, w1, b1, w2, b2, tb=1024)

    # Larger case exercising a multi-step batch grid with a ragged (padded) last tile.
    x_big = jax.random.normal(k_x2, (300, hidden_size), dtype=jnp.float32)
    _check(x_big, w1, b1, w2, b2, tb=128)

    print("KERNEL_OK")
</pallas_src>

<mosaic_0001>
module attributes {stable_mosaic.version = 11 : i64} {
  func.func @mlp_kernel(%arg0: i32, %arg1: memref<8x32xf32, #tpu.memory_space<vmem>>, %arg2: memref<32x128xf32, #tpu.memory_space<vmem>>, %arg3: memref<1x128xf32, #tpu.memory_space<vmem>>, %arg4: memref<128x128xf32, #tpu.memory_space<vmem>>, %arg5: memref<1x128xf32, #tpu.memory_space<vmem>>, %arg6: memref<8x128xf32, #tpu.memory_space<vmem>>, %arg7: memref<8x128xf32, #tpu.memory_space<vmem>>) attributes {dimension_semantics = [#tpu.dimension_semantics<parallel>], iteration_bounds = array<i64: 1>, scalar_prefetch = 0 : i64, scratch_operands = 0 : i64, tpu.core_type = #tpu.core_type<tc>, window_params = [{transform_indices = @transform_0, window_bounds = array<i64: 8, 32>}, {pipeline_mode = #tpu.pipeline_mode<synchronous>, transform_indices = @transform_1, window_bounds = array<i64: 32, 128>}, {pipeline_mode = #tpu.pipeline_mode<synchronous>, transform_indices = @transform_2, window_bounds = array<i64: 1, 128>}, {pipeline_mode = #tpu.pipeline_mode<synchronous>, transform_indices = @transform_3, window_bounds = array<i64: 128, 128>}, {pipeline_mode = #tpu.pipeline_mode<synchronous>, transform_indices = @transform_4, window_bounds = array<i64: 1, 128>}, {transform_indices = @transform_5, window_bounds = array<i64: 8, 128>}, {transform_indices = @transform_6, window_bounds = array<i64: 8, 128>}]} {
    %c0 = arith.constant 0 : index
    %c0_0 = arith.constant 0 : index
    %0 = vector.load %arg1[%c0, %c0_0] : memref<8x32xf32, #tpu.memory_space<vmem>>, vector<8x32xf32>
    %c0_1 = arith.constant 0 : index
    %c0_2 = arith.constant 0 : index
    %1 = vector.load %arg2[%c0_1, %c0_2] : memref<32x128xf32, #tpu.memory_space<vmem>>, vector<32x128xf32>
    %cst = arith.constant dense<0.000000e+00> : vector<8x128xf32>
    %2 = tpu.matmul %0, %1, %cst {dimension_numbers = #tpu.dot_dimension_numbers<[1], [0], [0], [1], [0, 0, 1, 1], [], []>} : vector<8x32xf32>, vector<32x128xf32>, vector<8x128xf32> -> vector<8x128xf32>
    %c0_3 = arith.constant 0 : index
    %c0_4 = arith.constant 0 : index
    %3 = vector.load %arg3[%c0_3, %c0_4] : memref<1x128xf32, #tpu.memory_space<vmem>>, vector<1x128xf32>
    %4 = vector.broadcast %3 : vector<1x128xf32> to vector<8x128xf32>
    %5 = arith.addf %2, %4 : vector<8x128xf32>
    %cst_5 = arith.constant 0.000000e+00 : f32
    %6 = vector.broadcast %cst_5 : f32 to vector<8x128xf32>
    %7 = arith.maximumf %5, %6 : vector<8x128xf32>
    %c0_6 = arith.constant 0 : index
    %c0_7 = arith.constant 0 : index
    %8 = vector.load %arg6[%c0_6, %c0_7] : memref<8x128xf32, #tpu.memory_space<vmem>>, vector<8x128xf32>
    tpu.vector_store %arg6[%c0_6, %c0_7], %7 {strides = array<i32>} : memref<8x128xf32, #tpu.memory_space<vmem>>, vector<8x128xf32>,
    %c0_8 = arith.constant 0 : index
    %c0_9 = arith.constant 0 : index
    %9 = vector.load %arg4[%c0_8, %c0_9] : memref<128x128xf32, #tpu.memory_space<vmem>>, vector<128x128xf32>
    %cst_10 = arith.constant dense<0.000000e+00> : vector<8x128xf32>
    %10 = tpu.matmul %7, %9, %cst_10 {dimension_numbers = #tpu.dot_dimension_numbers<[1], [0], [0], [1], [0, 0, 1, 1], [], []>} : vector<8x128xf32>, vector<128x128xf32>, vector<8x128xf32> -> vector<8x128xf32>
    %c0_11 = arith.constant 0 : index
    %c0_12 = arith.constant 0 : index
    %11 = vector.load %arg5[%c0_11, %c0_12] : memref<1x128xf32, #tpu.memory_space<vmem>>, vector<1x128xf32>
    %12 = vector.broadcast %11 : vector<1x128xf32> to vector<8x128xf32>
    %13 = arith.addf %10, %12 : vector<8x128xf32>
    %cst_13 = arith.constant dense<0xFF800000> : vector<8xf32>
    %14 = vector.multi_reduction <maximumf>, %13, %cst_13 [1] : vector<8x128xf32> to vector<8xf32>
    %15 = vector.shape_cast %14 : vector<8xf32> to vector<8x1xf32>
    %16 = vector.broadcast %15 : vector<8x1xf32> to vector<8x128xf32>
    %17 = arith.subf %13, %16 : vector<8x128xf32>
    %18 = math.exp %17 : vector<8x128xf32>
    %cst_14 = arith.constant dense<0.000000e+00> : vector<8xf32>
    %19 = vector.multi_reduction <add>, %18, %cst_14 [1] : vector<8x128xf32> to vector<8xf32>
    %20 = vector.shape_cast %19 : vector<8xf32> to vector<8x1xf32>
    %21 = tpu.reciprocal %20 {approx = true} : vector<8x1xf32> -> vector<8x1xf32>
    %22 = vector.broadcast %21 : vector<8x1xf32> to vector<8x128xf32>
    %23 = arith.mulf %18, %22 : vector<8x128xf32>
    %c0_15 = arith.constant 0 : index
    %c0_16 = arith.constant 0 : index
    %24 = vector.load %arg7[%c0_15, %c0_16] : memref<8x128xf32, #tpu.memory_space<vmem>>, vector<8x128xf32>
    tpu.vector_store %arg7[%c0_15, %c0_16], %23 {strides = array<i32>} : memref<8x128xf32, #tpu.memory_space<vmem>>, vector<8x128xf32>,
    return
  }
  func.func @transform_0(%arg0: i32) -> (i32, i32) {
    %c0_i32 = arith.constant 0 : i32
    %c0_i32_0 = arith.constant 0 : i32
    return %arg0, %c0_i32 : i32, i32
  }
  func.func @transform_1(%arg0: i32) -> (i32, i32) {
    %c0_i32 = arith.constant 0 : i32
    %c0_i32_0 = arith.constant 0 : i32
    %c0_i32_1 = arith.constant 0 : i32
    return %c0_i32, %c0_i32_0 : i32, i32
  }
  func.func @transform_2(%arg0: i32) -> (i32, i32) {
    %c0_i32 = arith.constant 0 : i32
    %c0_i32_0 = arith.constant 0 : i32
    %c0_i32_1 = arith.constant 0 : i32
    return %c0_i32, %c0_i32_0 : i32, i32
  }
  func.func @transform_3(%arg0: i32) -> (i32, i32) {
    %c0_i32 = arith.constant 0 : i32
    %c0_i32_0 = arith.constant 0 : i32
    %c0_i32_1 = arith.constant 0 : i32
    return %c0_i32, %c0_i32_0 : i32, i32
  }
  func.func @transform_4(%arg0: i32) -> (i32, i32) {
    %c0_i32 = arith.constant 0 : i32
    %c0_i32_0 = arith.constant 0 : i32
    %c0_i32_1 = arith.constant 0 : i32
    return %c0_i32, %c0_i32_0 : i32, i32
  }
  func.func @transform_5(%arg0: i32) -> (i32, i32) {
    %c0_i32 = arith.constant 0 : i32
    %c0_i32_0 = arith.constant 0 : i32
    return %arg0, %c0_i32 : i32, i32
  }
  func.func @transform_6(%arg0: i32) -> (i32, i32) {
    %c0_i32 = arith.constant 0 : i32
    %c0_i32_0 = arith.constant 0 : i32
    return %arg0, %c0_i32 : i32, i32
  }
}

</mosaic_0001>

<llo_original>
// kernel: tpu_custom_call.1
$region0: #{tpu_custom_call.1}
  #allocation0 [shape = 'u32[]', space=smem, size = 0x4, offset = 0x4, fixed_abs, tag = 'smem constant byte address 0x4 - core index']
  #allocation1 [shape = 'u32[72,128]{1,0:T(1,128)}', space=vmem, size = 0x9000, scoped, tag = 'internal scratch']
  %s0 = inlined_call_operand.hbm [shape: f32[8,32], index: 0, kind: input, shape index: {}]
  %s1 = inlined_call_operand.hbm [shape: f32[32,128], index: 1, kind: input, shape index: {}]
  %s2 = inlined_call_operand.vmem [shape: f32[1,128], index: 2, kind: input, shape index: {}]
  %s3 = inlined_call_operand.hbm [shape: f32[128,128], index: 3, kind: input, shape index: {}]
  %s4 = inlined_call_operand.vmem [shape: f32[1,128], index: 4, kind: input, shape index: {}]
  %s5 = inlined_call_operand.hbm [shape: f32[8,128], index: 5, kind: output, shape index: {0}]
  %s6 = inlined_call_operand.hbm [shape: f32[8,128], index: 6, kind: output, shape index: {1}]
  %7 = xla_tuple %s5, %s6
  %s8 = sld [smem:[#allocation0]]
  $region50: #{tpu_custom_call.1} parent=0
    _
  %s10 = ssub.s32 1, %s8
  %s11 = scalar_select 0, %s10, %s8
  $region1: #{tpu_custom_call.1} parent=0
    #allocation2 [shape = 'u8[4096]{0}', space=vmem, size = 0x1000, scoped, tag = 'input window, operand 0, single buffered']
    #allocation3 [shape = 's32[1]{0}', space=sflag, size = 0x4, scoped, tag = 'scoped memory for tpu_custom_call.1']
    #allocation4 [shape = 's32[1]{0}', space=sflag, size = 0x4, scoped, tag = 'scoped memory for tpu_custom_call.1']
    #allocation5 [shape = 'u8[16384]{0}', space=vmem, size = 0x4000, scoped, tag = 'input window, operand 1, single buffered']
    #allocation6 [shape = 's32[1]{0}', space=sflag, size = 0x4, scoped, tag = 'scoped memory for tpu_custom_call.1']
    #allocation7 [shape = 'u8[65536]{0}', space=vmem, size = 0x10000, scoped, tag = 'input window, operand 3, single buffered']
    #allocation8 [shape = 'u8[4096]{0}', space=vmem, size = 0x1000, scoped, tag = 'output window, operand 0, single buffered']
    #allocation9 [shape = 'u8[4096]{0}', space=vmem, size = 0x1000, scoped, tag = 'output window, operand 1, single buffered']
    #allocation10 [shape = 's32[1]{0}', space=sflag, size = 0x4, scoped, tag = 'scoped memory for tpu_custom_call.1']
    %12 = vsyncpa [#allocation3], 0
    %13 = vsyncpa [#allocation6], 0
    %14 = vsyncpa [#allocation4], 0
    %15 = vsyncpa [#allocation10], 0
    // Predicated region
    $region2: #{tpu_custom_call.1} parent=1 // pred_check
      _
    $region3: #{tpu_custom_call.1} parent=1 // pred_check_branch
      %17 = sbr.rel (0) target = $region5
    $region4: #{tpu_custom_call.1} parent=1 // pred_region
      %19 = vsyncadd [#allocation3], 0
      %s21 = sshll.u32 %s0, 4
      %s22 = int_to_ptr.hbm [resolvable:$true] %s21
      %s23 = sshll.u32 [#allocation2], 4
      %s24 = int_to_ptr.vmem [resolvable:$true] %s23
      %26 = dma.hbm_to_vmem [thread:$0]  %s22, 128, %s24, [#allocation3]
    $region5: #{tpu_custom_call.1} parent=1 // pred_fallthru
      _
    // Predicated region
    $region6: #{tpu_custom_call.1} parent=1 // pred_check
      _
    $region7: #{tpu_custom_call.1} parent=1 // pred_check_branch
      %28 = sbr.rel (0) target = $region9
    $region8: #{tpu_custom_call.1} parent=1 // pred_region
      %30 = vsyncadd [#allocation6], 0
      %s31 = sshll.u32 %s1, 4
      %s32 = int_to_ptr.hbm [resolvable:$true] %s31
      %s33 = sshll.u32 [#allocation5], 4
      %s34 = int_to_ptr.vmem [resolvable:$true] %s33
      %39 = dma.hbm_to_vmem [thread:$0]  %s32, 512, %s34, [#allocation6], 128, 128, 8
    $region9: #{tpu_custom_call.1} parent=1 // pred_fallthru
      _
    // Predicated region
    $region10: #{tpu_custom_call.1} parent=1 // pred_check
      _
    $region11: #{tpu_custom_call.1} parent=1 // pred_check_branch
      %41 = sbr.rel (0) target = $region13
    $region12: #{tpu_custom_call.1} parent=1 // pred_region
      _
    $region13: #{tpu_custom_call.1} parent=1 // pred_fallthru
      _
    // Predicated region
    $region14: #{tpu_custom_call.1} parent=1 // pred_check
      _
    $region15: #{tpu_custom_call.1} parent=1 // pred_check_branch
      %43 = sbr.rel (0) target = $region17
    $region16: #{tpu_custom_call.1} parent=1 // pred_region
      %45 = vsyncadd [#allocation6], 0
      %s46 = sshll.u32 %s3, 4
      %s47 = int_to_ptr.hbm [resolvable:$true] %s46
      %s48 = sshll.u32 [#allocation7], 4
      %s49 = int_to_ptr.vmem [resolvable:$true] %s48
      %54 = dma.hbm_to_vmem [thread:$0]  %s47, 2048, %s49, [#allocation6], 128, 128, 8
    $region17: #{tpu_custom_call.1} parent=1 // pred_fallthru
      _
    // Predicated region
    $region18: #{tpu_custom_call.1} parent=1 // pred_check
      _
    $region19: #{tpu_custom_call.1} parent=1 // pred_check_branch
      %56 = sbr.rel (0) target = $region21
    $region20: #{tpu_custom_call.1} parent=1 // pred_region
      _
    $region21: #{tpu_custom_call.1} parent=1 // pred_fallthru
      _
    // Predicated region
    $region22: #{tpu_custom_call.1} parent=1 // pred_check
      _
    $region23: #{tpu_custom_call.1} parent=1 // pred_check_branch
      %58 = sbr.rel (0) target = $region25
    $region24: #{tpu_custom_call.1} parent=1 // pred_region
      %60 = dma.done [#allocation3], 128
    $region25: #{tpu_custom_call.1} parent=1 // pred_fallthru
      _
    // Predicated region
    $region26: #{tpu_custom_call.1} parent=1 // pred_check
      _
    $region27: #{tpu_custom_call.1} parent=1 // pred_check_branch
      %62 = sbr.rel (0) target = $region29
    $region28: #{tpu_custom_call.1} parent=1 // pred_region
      %64 = dma.done [#allocation6], 512
    $region29: #{tpu_custom_call.1} parent=1 // pred_fallthru
      _
    // Predicated region
    $region30: #{tpu_custom_call.1} parent=1 // pred_check
      _
    $region31: #{tpu_custom_call.1} parent=1 // pred_check_branch
      %66 = sbr.rel (0) target = $region33
    $region32: #{tpu_custom_call.1} parent=1 // pred_region
      %68 = dma.done [#allocation6], 2048
    $region33: #{tpu_custom_call.1} parent=1 // pred_fallthru
      _
    %v69 = vld [vmem:[#allocation2] sm:$0xff]
    %v70 = vld [vmem:[#allocation5] sm:$0xff]
    %v71 = vld [vmem:[#allocation5 + $0x8] sm:$0xff]
    %v72 = vld [vmem:[#allocation5 + $0x10] sm:$0xff]
    %v73 = vld [vmem:[#allocation5 + $0x18] sm:$0xff]
    %v74 = vld [vmem:[%s2] sm:$0x1]
    %v76 = vperm.slane %v74, 0
    %vm78 = vcmask 261120
    %v80 = vsel %vm78, %v69, 0
    %82 = vmatpush.msra.mxu0 0.0
    %83 = vmatpush.msra.mxu0 0.0
    %84 = vmatpush.msra.mxu0 0.0
    %85 = vmatpush.msra.mxu0 0.0
    %86 = vmatpush.msra.mxu0 0.0
    %87 = vmatpush.msra.mxu0 0.0
    %88 = vmatpush.msra.mxu0 0.0
    %89 = vmatpush.msra.mxu0 0.0
    %90 = vmatpush.msra.mxu0 0.0
    %91 = vmatpush.msra.mxu0 0.0
    %92 = vmatpush.msra.mxu0 0.0
    %93 = vmatpush.msra.mxu0 0.0
    %94 = vmatpush.msra.mxu0 %v73
    %95 = vmatpush.msra.mxu0 %v72
    %96 = vmatpush.msra.mxu0 %v71
    %97 = vmatpush.msra.mxu0 %v70
    %98 = vmatmul.f32.gmra.mxu0 %v80
    %v99 = vpop.f32.mrf.mxu0
    %v100 = vadd.f32 %v76, %v99
    %101 = vdwg.mxu0
    %v102 = vmax.f32 %v100, 0.0
    %103 = vst [vmem:[#allocation8] sm:$0xff] %v102
    %v104 = vld [vmem:[#allocation7] sm:$0xff]
    %v105 = vld [vmem:[#allocation7 + $0x8] sm:$0xff]
    %v106 = vld [vmem:[#allocation7 + $0x10] sm:$0xff]
    %v107 = vld [vmem:[#allocation7 + $0x18] sm:$0xff]
    %v108 = vld [vmem:[#allocation7 + $0x20] sm:$0xff]
    %v109 = vld [vmem:[#allocation7 + $0x28] sm:$0xff]
    %v110 = vld [vmem:[#allocation7 + $0x30] sm:$0xff]
    %v111 = vld [vmem:[#allocation7 + $0x38] sm:$0xff]
    %v112 = vld [vmem:[#allocation7 + $0x40] sm:$0xff]
    %v113 = vld [vmem:[#allocation7 + $0x48] sm:$0xff]
    %v114 = vld [vmem:[#allocation7 + $0x50] sm:$0xff]
    %v115 = vld [vmem:[#allocation7 + $0x58] sm:$0xff]
    %v116 = vld [vmem:[#allocation7 + $0x60] sm:$0xff]
    %v117 = vld [vmem:[#allocation7 + $0x68] sm:$0xff]
    %v118 = vld [vmem:[#allocation7 + $0x70] sm:$0xff]
    %v119 = vld [vmem:[#allocation7 + $0x78] sm:$0xff]
    %v120 = vld [vmem:[%s4] sm:$0x1]
    %v122 = vperm.slane %v120, 0
    %124 = vmatpush.msra.mxu0 %v119
    %125 = vmatpush.msra.mxu0 %v118
    %126 = vmatpush.msra.mxu0 %v117
    %127 = vmatpush.msra.mxu0 %v116
    %128 = vmatpush.msra.mxu0 %v115
    %129 = vmatpush.msra.mxu0 %v114
    %130 = vmatpush.msra.mxu0 %v113
    %131 = vmatpush.msra.mxu0 %v112
    %132 = vmatpush.msra.mxu0 %v111
    %133 = vmatpush.msra.mxu0 %v110
    %134 = vmatpush.msra.mxu0 %v109
    %135 = vmatpush.msra.mxu0 %v108
    %136 = vmatpush.msra.mxu0 %v107
    %137 = vmatpush.msra.mxu0 %v106
    %138 = vmatpush.msra.mxu0 %v105
    %139 = vmatpush.msra.mxu0 %v104
    %140 = vmatmul.f32.gmra.mxu0 %v102
    %v141 = vpop.f32.mrf.mxu0
    %v142 = vadd.f32 %v122, %v141
    %143 = vdwg.mxu0
    %144 = vmax.xlane.f32.xlu0 %v142
    %v145 = vpop.xlane.xlu0 %144
    %v146 = vsub.f32 %v142, %v145
    %v147 = vmul.f32 %v146, 1.442695
    %v148 = vpow.pop %v147
    %149 = vadd.xlane.f32.xlu0 %v148
    %v150 = vpop.xlane.xlu0 %149
    %v151 = vrcp.pop %v150
    %v152 = vmul.f32 %v148, %v151
    %153 = vst [vmem:[#allocation9] sm:$0xff] %v152
    // Predicated region
    $region34: #{tpu_custom_call.1} parent=1 // pred_check
      _
    $region35: #{tpu_custom_call.1} parent=1 // pred_check_branch
      %155 = sbr.rel (0) target = $region37
    $region36: #{tpu_custom_call.1} parent=1 // pred_region
      %157 = vsyncadd [#allocation4], 0
      %s159 = sshll.u32 [#allocation8], 4
      %s160 = int_to_ptr.vmem [resolvable:$true] %s159
      %s161 = sshll.u32 %s5, 4
      %s162 = int_to_ptr.hbm [resolvable:$true] %s161
      %164 = dma.vmem_to_hbm [thread:$0]  %s160, 128, %s162, [#allocation4]
    $region37: #{tpu_custom_call.1} parent=1 // pred_fallthru
      _
    // Predicated region
    $region38: #{tpu_custom_call.1} parent=1 // pred_check
      _
    $region39: #{tpu_custom_call.1} parent=1 // pred_check_branch
      %166 = sbr.rel (0) target = $region41
    $region40: #{tpu_custom_call.1} parent=1 // pred_region
      %168 = vsyncadd [#allocation10], 0
      %s170 = sshll.u32 [#allocation9], 4
      %s171 = int_to_ptr.vmem [resolvable:$true] %s170
      %s172 = sshll.u32 %s6, 4
      %s173 = int_to_ptr.hbm [resolvable:$true] %s172
      %175 = dma.vmem_to_hbm [thread:$0]  %s171, 128, %s173, [#allocation10]
    $region41: #{tpu_custom_call.1} parent=1 // pred_fallthru
      _
    // Predicated region
    $region42: #{tpu_custom_call.1} parent=1 // pred_check
      _
    $region43: #{tpu_custom_call.1} parent=1 // pred_check_branch
      %177 = sbr.rel (0) target = $region45
    $region44: #{tpu_custom_call.1} parent=1 // pred_region
      %179 = dma.done [#allocation4], 128
    $region45: #{tpu_custom_call.1} parent=1 // pred_fallthru
      _
    // Predicated region
    $region46: #{tpu_custom_call.1} parent=1 // pred_check
      _
    $region47: #{tpu_custom_call.1} parent=1 // pred_check_branch
      %181 = sbr.rel (0) target = $region49
    $region48: #{tpu_custom_call.1} parent=1 // pred_region
      %183 = dma.done [#allocation10], 128
    $region49: #{tpu_custom_call.1} parent=1 // pred_fallthru
      _
    %184 = vsyncpa [#allocation3], 1
    %185 = vsyncpa [#allocation6], 1
    %186 = vsyncpa [#allocation4], 1
    %187 = vsyncpa [#allocation10], 1

</llo_original>
